<compile_context>
chip_gen: v5e
topology: v5e:2x2
jax: 0.10.0
libtpu: 0.0.40
codegen_flags: <defaults>
</compile_context>

<pallas_src>
import functools

import jax
import jax.numpy as jnp
from jax.experimental import pallas as pl
from jax.experimental.pallas import tpu as pltpu


_ANCHOR_EVERY = 4   # re-anchor double-angle recurrence every N bands (accuracy)


def _make_freq_bands(max_freq_log2, n_freqs, log_sampling=True):
    # Matches torch.linspace semantics (float32; n_freqs == 1 -> [1.0]).
    if log_sampling:
        bands = 2.0 ** jnp.linspace(0.0, float(max_freq_log2), int(n_freqs))
    else:
        bands = jnp.linspace(2.0 ** 0.0, 2.0 ** float(max_freq_log2),
                             int(n_freqs))
    return [float(b) for b in jax.device_get(bands)]


def _round_up(a, b):
    return (a + b - 1) // b * b


def _embedder_kernel(xt_ref, o_ref, *, freq_bands, include_input,
                     use_double_angle, out_dim):
    # xt_ref : [D, TN]        feature-major (rows on the 128-lane axis)
    # o_ref  : [TN, out_dim]  row-major output block (PyTorch layout)
    x = xt_ref[...].astype(jnp.float32)                  # (D, TN) lane-dense
    parts = []
    if include_input:
        parts.append(x)

    if use_double_angle:
        # Bands are exactly 1, 2, 4, ... -> direct sin/cos only every
        # _ANCHOR_EVERY bands; the rest are VPU double-angle recurrences.
        # (2*f*x is exact in f32, so the recurrence targets the same angle as
        #  the reference; error growth is capped by re-anchoring.)
        s = c = None
        for i, f in enumerate(freq_bands):
            if i % _ANCHOR_EVERY == 0:
                xf = x * f
                s = jnp.sin(xf)
                c = jnp.cos(xf)
            else:
                s, c = 2.0 * s * c, c * c - s * s
            parts.append(s)
            parts.append(c)
    else:
        for f in freq_bands:
            xf = x * f
            parts.append(jnp.sin(xf))
            parts.append(jnp.cos(xf))

    # Pad the feature (sublane) axis to a multiple of 8 so the single in-kernel
    # transpose is tile-aligned; assemble feature-major, transpose once, store
    # the row-major block.
    pad = (-out_dim) % 8
    if pad:
        parts.append(jnp.zeros((pad, x.shape[1]), jnp.float32))
    assembled = jnp.concatenate(parts, axis=0)           # (out_dim_pad, TN)
    o_ref[...] = assembled.T[:, :out_dim].astype(o_ref.dtype)


def embedder_forward(x, *, max_freq_log2, n_freqs, log_sampling=True,
                     include_input=True, tile_n=8192):
    """x: [..., input_dim] -> [..., out_dim]   (PyTorch concat order)."""
    input_dim = x.shape[-1]
    freq_bands = _make_freq_bands(max_freq_log2, n_freqs, log_sampling)
    out_dim = (input_dim if include_input else 0) + input_dim * n_freqs * 2

    # Double-angle path only when bands are exactly 1, 2, 4, ... (standard
    # NeRF config); otherwise the always-exact direct sin/cos path.
    use_double_angle = bool(log_sampling) and all(
        float(b) == float(2.0 ** i) for i, b in enumerate(freq_bands))

    lead_shape = x.shape[:-1]
    rows = 1
    for s in lead_shape:
        rows *= s

    # Feature-major input [D, rows]: tiny wrapper transpose (input is out_dim/D
    # times smaller than the output); puts rows on the lane axis in-kernel.
    xt = x.reshape(rows, input_dim).T

    # Large row blocks (multiple of 128 lanes), clamped for small inputs.
    tile_n = max(128, min(int(tile_n), _round_up(rows, 128)))
    tile_n = _round_up(tile_n, 128)
    grid = (pl.cdiv(rows, tile_n),)   # ragged final block; OOB rows not written

    kernel = functools.partial(
        _embedder_kernel, freq_bands=freq_bands, include_input=include_input,
        use_double_angle=use_double_angle, out_dim=out_dim)

    out = pl.pallas_call(
        kernel,
        out_shape=jax.ShapeDtypeStruct((rows, out_dim), x.dtype),
        grid_spec=pltpu.PrefetchScalarGridSpec(
            num_scalar_prefetch=0,
            grid=grid,
            in_specs=[pl.BlockSpec((input_dim, tile_n), lambda i: (0, i))],
            out_specs=pl.BlockSpec((tile_n, out_dim), lambda i: (i, 0)),
        ),
        compiler_params=pltpu.CompilerParams(
            dimension_semantics=("parallel",),
            vmem_limit_bytes=48 * 1024 * 1024),
    )(xt)

    return out.reshape(*lead_shape, out_dim)


def embedder_reference(x, *, max_freq_log2, n_freqs, log_sampling=True,
                       include_input=True):
    freq_bands = _make_freq_bands(max_freq_log2, n_freqs, log_sampling)
    parts = []
    if include_input:
        parts.append(x)
    for f in freq_bands:
        parts.append(jnp.sin(x * f))
        parts.append(jnp.cos(x * f))
    return jnp.concatenate(parts, axis=-1)


if __name__ == "__main__":
    k1, k2, k3 = jax.random.split(jax.random.PRNGKey(0), 3)

    # Config 1: classic small NeRF-style embedding (3-D input, 4 doubling
    #           bands) -> exercises the double-angle recurrence path.
    x1 = jax.random.normal(k1, (2, 64, 3), dtype=jnp.float32)
    out1 = jax.block_until_ready(
        embedder_forward(x1, max_freq_log2=3.0, n_freqs=4,
                         log_sampling=True, include_input=True))
    ref1 = embedder_reference(x1, max_freq_log2=3.0, n_freqs=4,
                              log_sampling=True, include_input=True)
    assert out1.shape == (2, 64, 3 + 3 * 4 * 2), out1.shape
    assert float(jnp.max(jnp.abs(out1 - ref1))) < 5e-5

    # Config 2: ragged row count (250 rows in a 256-row block), non-doubling
    #           bands (direct sin/cos path), include_input=False.
    x2 = jax.random.normal(k2, (5, 50, 3), dtype=jnp.float32)
    out2 = jax.block_until_ready(
        embedder_forward(x2, max_freq_log2=3.0, n_freqs=5,
                         log_sampling=True, include_input=False))
    ref2 = embedder_reference(x2, max_freq_log2=3.0, n_freqs=5,
                              log_sampling=True, include_input=False)
    assert out2.shape == (5, 50, 3 * 5 * 2), out2.shape
    assert float(jnp.max(jnp.abs(out2 - ref2))) < 1e-5

    # Config 3: full NeRF xyz embedding (10 doubling bands up to 2^9)
    #           -> exercises anchored double-angle over a long band chain.
    #           Loose tolerance covers sin/cos argument-reduction differences
    #           at large angles (up to ~512*|x|).
    x3 = jax.random.normal(k3, (4, 32, 3), dtype=jnp.float32)
    out3 = jax.block_until_ready(
        embedder_forward(x3, max_freq_log2=9.0, n_freqs=10,
                         log_sampling=True, include_input=True))
    ref3 = embedder_reference(x3, max_freq_log2=9.0, n_freqs=10,
                              log_sampling=True, include_input=True)
    assert out3.shape == (4, 32, 3 + 3 * 10 * 2), out3.shape
    assert float(jnp.max(jnp.abs(out3 - ref3))) < 5e-4

    print("KERNEL_OK")
</pallas_src>

<mosaic_0001>
module attributes {stable_mosaic.version = 11 : i64} {
  func.func @_embedder_kernel(%arg0: i32, %arg1: memref<3x128xf32, #tpu.memory_space<vmem>>, %arg2: memref<128x27xf32, #tpu.memory_space<vmem>>) attributes {dimension_semantics = [#tpu.dimension_semantics<parallel>], iteration_bounds = array<i64: 1>, scalar_prefetch = 0 : i64, scratch_operands = 0 : i64, tpu.core_type = #tpu.core_type<tc>, window_params = [{transform_indices = @transform_0, window_bounds = array<i64: 3, 128>}, {transform_indices = @transform_1, window_bounds = array<i64: 128, 27>}]} {
    %c0 = arith.constant 0 : index
    %c0_0 = arith.constant 0 : index
    %0 = vector.load %arg1[%c0, %c0_0] : memref<3x128xf32, #tpu.memory_space<vmem>>, vector<3x128xf32>
    %cst = arith.constant 1.000000e+00 : f32
    %1 = vector.broadcast %cst : f32 to vector<3x128xf32>
    %2 = arith.mulf %0, %1 : vector<3x128xf32>
    %3 = math.sin %2 : vector<3x128xf32>
    %4 = math.cos %2 : vector<3x128xf32>
    %cst_1 = arith.constant 2.000000e+00 : f32
    %5 = vector.broadcast %cst_1 : f32 to vector<3x128xf32>
    %6 = arith.mulf %5, %3 : vector<3x128xf32>
    %7 = arith.mulf %6, %4 : vector<3x128xf32>
    %8 = arith.mulf %4, %4 : vector<3x128xf32>
    %9 = arith.mulf %3, %3 : vector<3x128xf32>
    %10 = arith.subf %8, %9 : vector<3x128xf32>
    %cst_2 = arith.constant 2.000000e+00 : f32
    %11 = vector.broadcast %cst_2 : f32 to vector<3x128xf32>
    %12 = arith.mulf %11, %7 : vector<3x128xf32>
    %13 = arith.mulf %12, %10 : vector<3x128xf32>
    %14 = arith.mulf %10, %10 : vector<3x128xf32>
    %15 = arith.mulf %7, %7 : vector<3x128xf32>
    %16 = arith.subf %14, %15 : vector<3x128xf32>
    %cst_3 = arith.constant 2.000000e+00 : f32
    %17 = vector.broadcast %cst_3 : f32 to vector<3x128xf32>
    %18 = arith.mulf %17, %13 : vector<3x128xf32>
    %19 = arith.mulf %18, %16 : vector<3x128xf32>
    %20 = arith.mulf %16, %16 : vector<3x128xf32>
    %21 = arith.mulf %13, %13 : vector<3x128xf32>
    %22 = arith.subf %20, %21 : vector<3x128xf32>
    %cst_4 = arith.constant 0.000000e+00 : f32
    %23 = vector.broadcast %cst_4 : f32 to vector<5x128xf32>
    %24 = tpu.concatenate %0, %3, %4, %7, %10, %13, %16, %19, %22, %23 in 0 : vector<3x128xf32>, vector<3x128xf32>, vector<3x128xf32>, vector<3x128xf32>, vector<3x128xf32>, vector<3x128xf32>, vector<3x128xf32>, vector<3x128xf32>, vector<3x128xf32>, vector<5x128xf32> -> vector<32x128xf32>
    %25 = tpu.transpose %24, [1, 0] : vector<32x128xf32> -> vector<128x32xf32>
    %26 = vector.extract_strided_slice %25 {offsets = [0, 0], sizes = [128, 27], strides = [1, 1]} : vector<128x32xf32> to vector<128x27xf32>
    %c0_5 = arith.constant 0 : index
    %c0_6 = arith.constant 0 : index
    %27 = vector.load %arg2[%c0_5, %c0_6] : memref<128x27xf32, #tpu.memory_space<vmem>>, vector<128x27xf32>
    tpu.vector_store %arg2[%c0_5, %c0_6], %26 {strides = array<i32>} : memref<128x27xf32, #tpu.memory_space<vmem>>, vector<128x27xf32>,
    return
  }
  func.func @transform_0(%arg0: i32) -> (i32, i32) {
    %c0_i32 = arith.constant 0 : i32
    %c0_i32_0 = arith.constant 0 : i32
    return %c0_i32, %arg0 : i32, i32
  }
  func.func @transform_1(%arg0: i32) -> (i32, i32) {
    %c0_i32 = arith.constant 0 : i32
    %c0_i32_0 = arith.constant 0 : i32
    return %arg0, %c0_i32 : i32, i32
  }
}

</mosaic_0001>

<llo_original>
// kernel: tpu_custom_call.1
$region0: #{tpu_custom_call.1}
  #allocation0 [shape = 'u32[]', space=smem, size = 0x4, offset = 0x4, fixed_abs, tag = 'smem constant byte address 0x4 - core index']
  #allocation1 [shape = 'u32[72,128]{1,0:T(1,128)}', space=vmem, size = 0x9000, scoped, tag = 'internal scratch']
  %s0 = inlined_call_operand.hbm [shape: f32[3,128], index: 0, kind: input, shape index: {}]
  %s1 = inlined_call_operand.vmem [shape: f32[128,27], index: 1, kind: output, shape index: {}]
  %s2 = sld [smem:[#allocation0]]
  $region18: #{tpu_custom_call.1} parent=0
    _
  %s4 = ssub.s32 1, %s2
  %s5 = scalar_select 0, %s4, %s2
  $region1: #{tpu_custom_call.1} parent=0
    #allocation2 [shape = 'u8[2048]{0}', space=vmem, size = 0x800, scoped, tag = 'input window, operand 0, single buffered']
    #allocation3 [shape = 's32[1]{0}', space=sflag, size = 0x4, scoped, tag = 'scoped memory for tpu_custom_call.1']
    %6 = vsyncpa [#allocation3], 0
    // Predicated region
    $region2: #{tpu_custom_call.1} parent=1 // pred_check
      _
    $region3: #{tpu_custom_call.1} parent=1 // pred_check_branch
      %8 = sbr.rel (0) target = $region5
    $region4: #{tpu_custom_call.1} parent=1 // pred_region
      %10 = vsyncadd [#allocation3], 0
      %s12 = sshll.u32 %s0, 4
      %s13 = int_to_ptr.hbm [resolvable:$true] %s12
      %s14 = sshll.u32 [#allocation2], 4
      %s15 = int_to_ptr.vmem [resolvable:$true] %s14
      %17 = dma.hbm_to_vmem [thread:$0]  %s13, 64, %s15, [#allocation3]
    $region5: #{tpu_custom_call.1} parent=1 // pred_fallthru
      _
    // Predicated region
    $region6: #{tpu_custom_call.1} parent=1 // pred_check
      _
    $region7: #{tpu_custom_call.1} parent=1 // pred_check_branch
      %19 = sbr.rel (0) target = $region9
    $region8: #{tpu_custom_call.1} parent=1 // pred_region
      %21 = dma.done [#allocation3], 64
    $region9: #{tpu_custom_call.1} parent=1 // pred_fallthru
      _
    %v22 = vld [vmem:[#allocation2] sm:$0x7]
    %v23 = vand.u32 2147483647, %v22
    %vm24 = vcmp.le.f32.partialorder %v23, 0.7853982
    %vm25 = vcmp.lt.s32.totalorder %v22, 0
    %v26 = vand.u32 %v22, 2139095040
    %v27 = vshrl.u32 %v26, 23
    %v28 = vsub.s32 %v27, 127
    %v29 = vand.u32 2147483647, %v22
    %v30 = vand.u32 %v29, 8388607
    %v31 = vor.u32 %v30, 8388608
    %v32 = vsub.s32 0, %v31
    %v33 = vadd.s32 %v28, 1
    %vm34 = vcmp.gt.s32.totalorder %v33, 0
    %v35 = vsel %vm34, %v33, 0
    %v36 = vshrl.u32 %v35, 5
    %v37 = vand.u32 %v35, 31
    %v38 = vsub.s32 32, %v37
    %v39 = vshrl.u32 683565275, %v38
    %v40 = vshll.u32 683565275, %v37
    %v41 = vshrl.u32 2475754826, %v38
    %v42 = vor.u32 %v40, %v41
    %v43 = vshll.u32 2475754826, %v37
    %v44 = vshrl.u32 2131351028, %v38
    %v45 = vor.u32 %v43, %v44
    %v46 = vshll.u32 2131351028, %v37
    %v47 = vshrl.u32 2102212464, %v38
    %v48 = vor.u32 %v46, %v47
    %v49 = vshll.u32 2102212464, %v37
    %v50 = vshrl.u32 920167782, %v38
    %v51 = vor.u32 %v49, %v50
    %v52 = vshll.u32 920167782, %v37
    %v53 = vshrl.u32 1326507024, %v38
    %v54 = vor.u32 %v52, %v53
    %vm55 = vcmp.lt.s32.totalorder %v36, 1
    %vm56 = vcmp.lt.s32.totalorder %v36, 2
    %vm57 = vcmp.lt.s32.totalorder %v36, 3
    %vm58 = vcmp.lt.s32.totalorder %v36, 4
    %v59 = vsel %vm55, %v39, %v42
    %v60 = vsel %vm58, %v48, 2102212464
    %v61 = vsel %vm57, %v45, %v60
    %v62 = vsel %vm56, %v59, %v61
    %v63 = vsel %vm55, %v42, %v45
    %v64 = vsel %vm58, %v51, 920167782
    %v65 = vsel %vm57, %v48, %v64
    %v66 = vsel %vm56, %v63, %v65
    %v67 = vsel %vm55, %v45, %v48
    %v68 = vsel %vm58, %v54, 1326507024
    %v69 = vsel %vm57, %v51, %v68
    %v70 = vsel %vm56, %v67, %v69
    %v71 = vshll.u32 %v31, 8
    %v72 = vand.u32 %v71, 65535
    %v73 = vshrl.u32 %v71, 16
    %v74 = vand.u32 %v70, 65535
    %v75 = vshrl.u32 %v70, 16
    %v76 = vmul.u32 %v72, %v74
    %v77 = vmul.u32 %v72, %v75
    %v78 = vmul.u32 %v73, %v74
    %v79 = vmul.u32 %v73, %v75
    %v80 = vshll.u32 %v77, 16
    %v81 = vshrl.u32 %v77, 16
    %v82 = vshll.u32 %v78, 16
    %v83 = vshrl.u32 %v78, 16
    %vm84 = vc.u32 %v76, %v80
    %v85 = vsel %vm84, 1, 0
    %v86 = vadd.s32 %v76, %v80
    %v87 = vadd.s32 %v79, %v85
    %vm88 = vc.u32 %v86, %v82
    %v89 = vsel %vm88, 1, 0
    %v90 = vadd.s32 %v86, %v82
    %v91 = vadd.s32 %v87, %v89
    %v92 = vadd.s32 %v91, %v81
    %v93 = vadd.s32 %v92, %v83
    %v94 = vand.u32 %v71, 65535
    %v95 = vshrl.u32 %v71, 16
    %v96 = vand.u32 %v66, 65535
    %v97 = vshrl.u32 %v66, 16
    %v98 = vmul.u32 %v94, %v96
    %v99 = vmul.u32 %v94, %v97
    %v100 = vmul.u32 %v95, %v96
    %v101 = vmul.u32 %v95, %v97
    %v102 = vshll.u32 %v99, 16
    %v103 = vshrl.u32 %v99, 16
    %v104 = vshll.u32 %v100, 16
    %v105 = vshrl.u32 %v100, 16
    %vm106 = vc.u32 %v98, %v102
    %v107 = vsel %vm106, 1, 0
    %v108 = vadd.s32 %v98, %v102
    %v109 = vadd.s32 %v101, %v107
    %vm110 = vc.u32 %v108, %v104
    %v111 = vsel %vm110, 1, 0
    %v112 = vadd.s32 %v108, %v104
    %v113 = vadd.s32 %v109, %v111
    %v114 = vadd.s32 %v113, %v103
    %v115 = vadd.s32 %v114, %v105
    %v116 = vmul.u32 %v71, %v62
    %v117 = vadd.s32 %v93, %v112
    %vm118 = vc.u32 %v93, %v112
    %v119 = vadd.s32 %v115, 1
    %v120 = vsel %vm118, %v119, %v115
    %v121 = vadd.s32 %v116, %v120
    %v122 = vadd.s32 %v121, 536870912
    %v123 = vshrl.u32 %v122, 30
    %v124 = vshll.u32 %v123, 30
    %v125 = vsub.s32 %v121, %v124
    %vm126 = vcmp.lt.s32.totalorder %v125, 0
    %v127 = vsub.s32 0, %v125
    %v128 = vsel %vm126, %v127, %v125
    %v129 = vclz %v128
    %v130 = vsub.s32 %v129, 2
    %vm131 = vcmp.gt.s32.totalorder 0, %v130
    %v132 = vsel %vm131, 0, %v130
    %v133 = vsub.s32 32, %v132
    %v134 = vshll.u32 %v125, %v132
    %v135 = vshrl.u32 %v117, %v133
    %v136 = vor.u32 %v134, %v135
    %v137 = vsub.s32 4294967266, %v132
    %v138 = vadd.s32 %v137, 127
    %v139 = vshll.u32 %v138, 23
    %v140 = vor.u32 4788187, %v139
    %v141 = vand.u32 2147483647, %v140
    %v143 = vcvt.s32.f32 %v136
    %v144 = vmul.f32 %v143, %v141
    %v145 = vxor.u32 %v144, 2147483648
    %v146 = vsel %vm25, %v145, %v144
    %v147 = vsub.s32 4, %v123
    %v148 = vsel %vm25, %v147, %v123
    %v149 = vsel %vm24, %v22, %v146
    %v150 = vsel %vm24, 0, %v148
    %v151 = vmul.f32 %v149, %v149
    %v152 = vmul.f32 %v151, -0.001358992
    %v153 = vadd.f32 %v152, 0.041655596
    %v154 = vmul.f32 %v151, %v153
    %v155 = vadd.f32 %v154, -0.4999988
    %v156 = vmul.f32 %v151, %v155
    %v157 = vadd.f32 1.0, %v156
    %v158 = vmul.f32 %v149, %v149
    %v159 = vmul.f32 %v158, -0.00019511016
    %v160 = vadd.f32 %v159, 0.008332121
    %v161 = vmul.f32 %v158, %v160
    %v162 = vadd.f32 %v161, -0.16666654
    %v163 = vmul.f32 %v158, %v162
    %v164 = vadd.f32 %v163, 1.0
    %v165 = vmul.f32 %v164, %v149
    %vm166 = vweird.f32 %v22
    %v167 = vadd.s32 %v150, 3
    %v168 = vand.u32 %v167, 3
    %vm169 = vcmp.lt.s32.totalorder %v168, 2
    %vm170 = vcmp.eq.s32.totalorder %v168, 0
    %v171 = vxor.u32 %v165, 2147483648
    %v172 = vsel %vm170, %v157, %v171
    %vm173 = vcmp.eq.s32.totalorder %v168, 2
    %v174 = vxor.u32 %v157, 2147483648
    %v175 = vsel %vm173, %v174, %v165
    %v176 = vsel %vm169, %v172, %v175
    %v177 = vsel %vm166, nan, %v176
    %v178 = vand.u32 2147483647, %v22
    %vm179 = vcmp.le.f32.partialorder %v178, 0.7853982
    %vm180 = vcmp.lt.s32.totalorder %v22, 0
    %v181 = vand.u32 %v22, 2139095040
    %v182 = vshrl.u32 %v181, 23
    %v183 = vsub.s32 %v182, 127
    %v184 = vand.u32 2147483647, %v22
    %v185 = vand.u32 %v184, 8388607
    %v186 = vor.u32 %v185, 8388608
    %v187 = vsub.s32 0, %v186
    %v188 = vadd.s32 %v183, 1
    %vm189 = vcmp.gt.s32.totalorder %v188, 0
    %v190 = vsel %vm189, %v188, 0
    %v191 = vshrl.u32 %v190, 5
    %v192 = vand.u32 %v190, 31
    %v193 = vsub.s32 32, %v192
    %v194 = vshrl.u32 683565275, %v193
    %v195 = vshll.u32 683565275, %v192
    %v196 = vshrl.u32 2475754826, %v193
    %v197 = vor.u32 %v195, %v196
    %v198 = vshll.u32 2475754826, %v192
    %v199 = vshrl.u32 2131351028, %v193
    %v200 = vor.u32 %v198, %v199
    %v201 = vshll.u32 2131351028, %v192
    %v202 = vshrl.u32 2102212464, %v193
    %v203 = vor.u32 %v201, %v202
    %v204 = vshll.u32 2102212464, %v192
    %v205 = vshrl.u32 920167782, %v193
    %v206 = vor.u32 %v204, %v205
    %v207 = vshll.u32 920167782, %v192
    %v208 = vshrl.u32 1326507024, %v193
    %v209 = vor.u32 %v207, %v208
    %vm210 = vcmp.lt.s32.totalorder %v191, 1
    %vm211 = vcmp.lt.s32.totalorder %v191, 2
    %vm212 = vcmp.lt.s32.totalorder %v191, 3
    %vm213 = vcmp.lt.s32.totalorder %v191, 4
    %v214 = vsel %vm210, %v194, %v197
    %v215 = vsel %vm213, %v203, 2102212464
    %v216 = vsel %vm212, %v200, %v215
    %v217 = vsel %vm211, %v214, %v216
    %v218 = vsel %vm210, %v197, %v200
    %v219 = vsel %vm213, %v206, 920167782
    %v220 = vsel %vm212, %v203, %v219
    %v221 = vsel %vm211, %v218, %v220
    %v222 = vsel %vm210, %v200, %v203
    %v223 = vsel %vm213, %v209, 1326507024
    %v224 = vsel %vm212, %v206, %v223
    %v225 = vsel %vm211, %v222, %v224
    %v226 = vshll.u32 %v186, 8
    %v227 = vand.u32 %v226, 65535
    %v228 = vshrl.u32 %v226, 16
    %v229 = vand.u32 %v225, 65535
    %v230 = vshrl.u32 %v225, 16
    %v231 = vmul.u32 %v227, %v229
    %v232 = vmul.u32 %v227, %v230
    %v233 = vmul.u32 %v228, %v229
    %v234 = vmul.u32 %v228, %v230
    %v235 = vshll.u32 %v232, 16
    %v236 = vshrl.u32 %v232, 16
    %v237 = vshll.u32 %v233, 16
    %v238 = vshrl.u32 %v233, 16
    %vm239 = vc.u32 %v231, %v235
    %v240 = vsel %vm239, 1, 0
    %v241 = vadd.s32 %v231, %v235
    %v242 = vadd.s32 %v234, %v240
    %vm243 = vc.u32 %v241, %v237
    %v244 = vsel %vm243, 1, 0
    %v245 = vadd.s32 %v241, %v237
    %v246 = vadd.s32 %v242, %v244
    %v247 = vadd.s32 %v246, %v236
    %v248 = vadd.s32 %v247, %v238
    %v249 = vand.u32 %v226, 65535
    %v250 = vshrl.u32 %v226, 16
    %v251 = vand.u32 %v221, 65535
    %v252 = vshrl.u32 %v221, 16
    %v253 = vmul.u32 %v249, %v251
    %v254 = vmul.u32 %v249, %v252
    %v255 = vmul.u32 %v250, %v251
    %v256 = vmul.u32 %v250, %v252
    %v257 = vshll.u32 %v254, 16
    %v258 = vshrl.u32 %v254, 16
    %v259 = vshll.u32 %v255, 16
    %v260 = vshrl.u32 %v255, 16
    %vm261 = vc.u32 %v253, %v257
    %v262 = vsel %vm261, 1, 0
    %v263 = vadd.s32 %v253, %v257
    %v264 = vadd.s32 %v256, %v262
    %vm265 = vc.u32 %v263, %v259
    %v266 = vsel %vm265, 1, 0
    %v267 = vadd.s32 %v263, %v259
    %v268 = vadd.s32 %v264, %v266
    %v269 = vadd.s32 %v268, %v258
    %v270 = vadd.s32 %v269, %v260
    %v271 = vmul.u32 %v226, %v217
    %v272 = vadd.s32 %v248, %v267
    %vm273 = vc.u32 %v248, %v267
    %v274 = vadd.s32 %v270, 1
    %v275 = vsel %vm273, %v274, %v270
    %v276 = vadd.s32 %v271, %v275
    %v277 = vadd.s32 %v276, 536870912
    %v278 = vshrl.u32 %v277, 30
    %v279 = vshll.u32 %v278, 30
    %v280 = vsub.s32 %v276, %v279
    %vm281 = vcmp.lt.s32.totalorder %v280, 0
    %v282 = vsub.s32 0, %v280
    %v283 = vsel %vm281, %v282, %v280
    %v284 = vclz %v283
    %v285 = vsub.s32 %v284, 2
    %vm286 = vcmp.gt.s32.totalorder 0, %v285
    %v287 = vsel %vm286, 0, %v285
    %v288 = vsub.s32 32, %v287
    %v289 = vshll.u32 %v280, %v287
    %v290 = vshrl.u32 %v272, %v288
    %v291 = vor.u32 %v289, %v290
    %v292 = vsub.s32 4294967266, %v287
    %v293 = vadd.s32 %v292, 127
    %v294 = vshll.u32 %v293, 23
    %v295 = vor.u32 4788187, %v294
    %v296 = vand.u32 2147483647, %v295
    %v298 = vcvt.s32.f32 %v291
    %v299 = vmul.f32 %v298, %v296
    %v300 = vxor.u32 %v299, 2147483648
    %v301 = vsel %vm180, %v300, %v299
    %v302 = vsub.s32 4, %v278
    %v303 = vsel %vm180, %v302, %v278
    %v304 = vsel %vm179, %v22, %v301
    %v305 = vsel %vm179, 0, %v303
    %v306 = vmul.f32 %v304, %v304
    %v307 = vmul.f32 %v306, -0.001358992
    %v308 = vadd.f32 %v307, 0.041655596
    %v309 = vmul.f32 %v306, %v308
    %v310 = vadd.f32 %v309, -0.4999988
    %v311 = vmul.f32 %v306, %v310
    %v312 = vadd.f32 1.0, %v311
    %v313 = vmul.f32 %v304, %v304
    %v314 = vmul.f32 %v313, -0.00019511016
    %v315 = vadd.f32 %v314, 0.008332121
    %v316 = vmul.f32 %v313, %v315
    %v317 = vadd.f32 %v316, -0.16666654
    %v318 = vmul.f32 %v313, %v317
    %v319 = vadd.f32 %v318, 1.0
    %v320 = vmul.f32 %v319, %v304
    %vm321 = vweird.f32 %v22
    %v322 = vand.u32 %v305, 3
    %vm323 = vcmp.lt.s32.totalorder %v322, 2
    %vm324 = vcmp.eq.s32.totalorder %v322, 0
    %v325 = vxor.u32 %v320, 2147483648
    %v326 = vsel %vm324, %v312, %v325
    %vm327 = vcmp.eq.s32.totalorder %v322, 2
    %v328 = vxor.u32 %v312, 2147483648
    %v329 = vsel %vm327, %v328, %v320
    %v330 = vsel %vm323, %v326, %v329
    %v331 = vsel %vm321, nan, %v330
    %v332 = vmul.f32 %v177, 2.0
    %v333 = vmul.f32 %v332, %v331
    %v334 = vmul.f32 %v331, %v331
    %v335 = vmul.f32 %v177, %v177
    %v336 = vsub.f32 %v334, %v335
    %v337 = vmul.f32 %v333, 2.0
    %v338 = vmul.f32 %v337, %v336
    %v339 = vmul.f32 %v336, %v336
    %v340 = vmul.f32 %v333, %v333
    %v341 = vsub.f32 %v339, %v340
    %v342 = vmul.f32 %v338, 2.0
    %v343 = vmul.f32 %v342, %v341
    %v344 = vmul.f32 %v341, %v341
    %v345 = vmul.f32 %v338, %v338
    %v346 = vsub.f32 %v344, %v345
    %v348 = vrot.slane %v177, 5
    %v351 = vrot.slane %v331, 2
    %v354 = vrot.slane %v333, 7
    %v357 = vrot.slane %v336, 4
    %v360 = vrot.slane %v338, 1
    %v363 = vrot.slane %v341, 6
    %v366 = vrot.slane %v343, 3
    %vm368 = vcmask 1042432
    %v369 = vsel %vm368, %v22, %v348
    %vm370 = vcmask 1045504
    %v371 = vsel %vm370, %v369, %v351
    %vm372 = vcmask 1040384
    %v373 = vsel %vm372, %v351, %v354
    %vm374 = vcmask 1043456
    %v375 = vsel %vm374, %v373, %v357
    %vm376 = vcmask 1046528
    %v377 = vsel %vm376, %v375, %v360
    %vm378 = vcmask 1041408
    %v379 = vsel %vm378, %v360, %v363
    %vm380 = vcmask 1044480
    %v381 = vsel %vm380, %v379, %v366
    %v382 = vsel %vm368, %v346, 0.0
    %383 = vxpose.xlu0.b32.start [1/16] %v371, 128
    %384 = vxpose.xlu0.b32.cont [2/16] %v377, 128
    %385 = vxpose.xlu0.b32.cont [3/16] %v381, 128
    %386 = vxpose.xlu0.b32.cont [4/16] %v382, 128
    %387 = vxpose.xlu0.b32.cont [5/16] 0.0, 128
    %388 = vxpose.xlu0.b32.cont [6/16] 0.0, 128
    %389 = vxpose.xlu0.b32.cont [7/16] 0.0, 128
    %390 = vxpose.xlu0.b32.cont [8/16] 0.0, 128
    %391 = vxpose.xlu0.b32.cont [9/16] 0.0, 128
    %392 = vxpose.xlu0.b32.cont [10/16] 0.0, 128
    %393 = vxpose.xlu0.b32.cont [11/16] 0.0, 128
    %394 = vxpose.xlu0.b32.cont [12/16] 0.0, 128
    %395 = vxpose.xlu0.b32.cont [13/16] 0.0, 128
    %396 = vxpose.xlu0.b32.cont [14/16] 0.0, 128
    %397 = vxpose.xlu0.b32.cont [15/16] 0.0, 128
    %398 = vxpose.xlu0.b32.end [16/16] 0.0, 128
    %v399 = vpop.trf.xlu0
    %v400 = vpop.trf.xlu0
    %v401 = vpop.trf.xlu0
    %v402 = vpop.trf.xlu0
    %v403 = vpop.trf.xlu0
    %v404 = vpop.trf.xlu0
    %v405 = vpop.trf.xlu0
    %v406 = vpop.trf.xlu0
    %v407 = vpop.trf.xlu0
    %v408 = vpop.trf.xlu0
    %v409 = vpop.trf.xlu0
    %v410 = vpop.trf.xlu0
    %v411 = vpop.trf.xlu0
    %v412 = vpop.trf.xlu0
    %v413 = vpop.trf.xlu0
    %v414 = vpop.trf.xlu0
    %vm415 = vcmask 220160
    %416 = vst.msk [vmem:[%s1] sm:$0xff] %vm415, %v399
    %417 = vst.msk [vmem:[%s1 + $0x8] sm:$0xff] %vm415, %v400
    %418 = vst.msk [vmem:[%s1 + $0x10] sm:$0xff] %vm415, %v401
    %419 = vst.msk [vmem:[%s1 + $0x18] sm:$0xff] %vm415, %v402
    %420 = vst.msk [vmem:[%s1 + $0x20] sm:$0xff] %vm415, %v403
    %421 = vst.msk [vmem:[%s1 + $0x28] sm:$0xff] %vm415, %v404
    %422 = vst.msk [vmem:[%s1 + $0x30] sm:$0xff] %vm415, %v405
    %423 = vst.msk [vmem:[%s1 + $0x38] sm:$0xff] %vm415, %v406
    %424 = vst.msk [vmem:[%s1 + $0x40] sm:$0xff] %vm415, %v407
    %425 = vst.msk [vmem:[%s1 + $0x48] sm:$0xff] %vm415, %v408
    %426 = vst.msk [vmem:[%s1 + $0x50] sm:$0xff] %vm415, %v409
    %427 = vst.msk [vmem:[%s1 + $0x58] sm:$0xff] %vm415, %v410
    %428 = vst.msk [vmem:[%s1 + $0x60] sm:$0xff] %vm415, %v411
    %429 = vst.msk [vmem:[%s1 + $0x68] sm:$0xff] %vm415, %v412
    %430 = vst.msk [vmem:[%s1 + $0x70] sm:$0xff] %vm415, %v413
    %431 = vst.msk [vmem:[%s1 + $0x78] sm:$0xff] %vm415, %v414
    // Predicated region
    $region10: #{tpu_custom_call.1} parent=1 // pred_check
      _
    $region11: #{tpu_custom_call.1} parent=1 // pred_check_branch
      %433 = sbr.rel (0) target = $region13
    $region12: #{tpu_custom_call.1} parent=1 // pred_region
      _
    $region13: #{tpu_custom_call.1} parent=1 // pred_fallthru
      _
    // Predicated region
    $region14: #{tpu_custom_call.1} parent=1 // pred_check
      _
    $region15: #{tpu_custom_call.1} parent=1 // pred_check_branch
      %435 = sbr.rel (0) target = $region17
    $region16: #{tpu_custom_call.1} parent=1 // pred_region
      _
    $region17: #{tpu_custom_call.1} parent=1 // pred_fallthru
      _
    %436 = vsyncpa [#allocation3], 1

</llo_original>
